<compile_context>
chip_gen: v5e
topology: v5e:2x2
jax: 0.10.0
libtpu: 0.0.40
codegen_flags: <defaults>
</compile_context>

<pallas_src>
import jax
import jax.numpy as jnp
from jax.experimental import pallas as pl
from jax.experimental.pallas import tpu as pltpu

STATE_EMB = 256
BODY_INFOS = 2
H1 = 512
H2 = 256
OUT_PAD = 128          # lane-dense padded output width (>= BODY_INFOS)


def _mlp_kernel(se_ref, bi_ref, w1a_ref, w1b_ref, b1_ref, w2_ref, b2_ref,
                w3p_ref, b3p_ref, o_ref):
    """Fused 3-layer MLP for one batch tile. Matmuls bf16->f32, epilogue f32."""
    # ---- Layer 1: MXU for the 256-wide state_emb part; cast to bf16 in-kernel
    #      (hides under MXU/DMA, avoids an extra HBM pass in the wrapper).
    se = se_ref[...].astype(jnp.bfloat16)                    # (TM, 256) bf16
    h1 = jnp.dot(se, w1a_ref[...],
                 preferred_element_type=jnp.float32)         # (TM, 512) f32

    # Two unrolled rank-1 VPU updates for the 2 body_infos columns (MXU slack is huge,
    # not worth a padded dot here).
    bi = bi_ref[...].astype(jnp.float32)                     # (TM, 2) f32
    w1b = w1b_ref[...].astype(jnp.float32)                   # (2, 512) f32
    for j in range(BODY_INFOS):
        h1 = h1 + bi[:, j:j + 1] * w1b[j:j + 1, :]
    h1 = jnp.maximum(h1 + b1_ref[...], 0.0)                  # bias + ReLU in f32

    # ---- Layer 2: (TM, 512) @ (512, 256) on the MXU.
    h2 = jnp.dot(h1.astype(jnp.bfloat16), w2_ref[...],
                 preferred_element_type=jnp.float32) + b2_ref[...]
    h2 = jnp.maximum(h2, 0.0)                                # (TM, 256) f32

    # ---- Layer 3: lane-dense padded MXU dot -> (TM, 128).  Padded columns of W3/b3
    #      are zero (sigmoid(0)=0.5 garbage, sliced away in the wrapper).
    logits = jnp.dot(h2.astype(jnp.bfloat16), w3p_ref[...],
                     preferred_element_type=jnp.float32) + b3p_ref[...]
    o_ref[...] = jax.nn.sigmoid(logits)                      # (TM, 128) f32, unmasked vst


def goal_state_predictor(state_emb, body_infos, params):
    """Batch-tiled pallas_call with resident weights; returns (B, BODY_INFOS)."""
    w1a, w1b, b1, w2, b2, w3p, b3p = params
    batch = state_emb.shape[0]

    # Batch tile is an overhead-amortization knob (per-step fixed cost ~0.35 us).
    # 512 rows keeps per-step MXU work well above the fixed cost while VMEM stays ~2 MiB.
    tm = min(512, batch)
    grid = (pl.cdiv(batch, tm),)

    def batch_spec(cols):
        return pl.BlockSpec((tm, cols), lambda i: (i, 0))

    def resident_spec(shape):
        # Constant block index -> DMA'd once, stays resident in VMEM across grid steps.
        return pl.BlockSpec(shape, lambda i: tuple(0 for _ in shape))

    flops = 2 * batch * (STATE_EMB * H1 + BODY_INFOS * H1 + H1 * H2 + H2 * OUT_PAD)
    bytes_accessed = (
        (w1a.size + w1b.size + w2.size + w3p.size) * 2       # bf16 weights
        + (b1.size + b2.size + b3p.size) * 4                 # f32 biases
        + batch * STATE_EMB * 4                              # f32 state_emb
        + batch * BODY_INFOS * 4                             # f32 body_infos
        + batch * OUT_PAD * 4                                # f32 padded output
    )
    cost = pl.CostEstimate(flops=flops,
                           transcendentals=batch * OUT_PAD,
                           bytes_accessed=bytes_accessed)

    out_padded = pl.pallas_call(
        _mlp_kernel,
        out_shape=jax.ShapeDtypeStruct((batch, OUT_PAD), jnp.float32),
        grid=grid,
        in_specs=[
            batch_spec(STATE_EMB),          # state_emb (f32; cast to bf16 in-kernel)
            batch_spec(BODY_INFOS),         # body_infos (f32)
            resident_spec(w1a.shape),       # (256, 512) bf16
            resident_spec(w1b.shape),       # (2, 512)   bf16
            resident_spec(b1.shape),        # (1, 512)   f32
            resident_spec(w2.shape),        # (512, 256) bf16
            resident_spec(b2.shape),        # (1, 256)   f32
            resident_spec(w3p.shape),       # (256, 128) bf16 (zero-padded)
            resident_spec(b3p.shape),       # (1, 128)   f32  (zero-padded)
        ],
        out_specs=batch_spec(OUT_PAD),
        compiler_params=pltpu.CompilerParams(
            # Independent batch tiles; allows dual-TC sharding on v7x.
            dimension_semantics=("parallel",),
        ),
        cost_estimate=cost,
    )(state_emb, body_infos, w1a, w1b, b1, w2, b2, w3p, b3p)

    # Drop padding columns (cheap XLA slice).
    return out_padded[:, :BODY_INFOS]


def init_params(key):
    """PyTorch-style Linear init U(-1/sqrt(fan_in), 1/sqrt(fan_in)).

    W1 is generated as one (258, 512) matrix (matches nn.Linear fan_in exactly) then
    split into W1a (state part) and W1b (body part).  Matmul weights are stored bf16
    and pre-transposed to (in, out); W3/b3 are zero-padded to 128 output columns for a
    lane-dense layer-3 MXU dot.  Biases stay f32 and 2D for TPU layout.
    """
    def linear(k, fan_in, fan_out):
        kw, kb = jax.random.split(k)
        bound = 1.0 / jnp.sqrt(float(fan_in))
        w = jax.random.uniform(kw, (fan_in, fan_out), jnp.float32, -bound, bound)
        b = jax.random.uniform(kb, (1, fan_out), jnp.float32, -bound, bound)
        return w, b

    k1, k2, k3 = jax.random.split(key, 3)
    w1, b1 = linear(k1, STATE_EMB + BODY_INFOS, H1)
    w2, b2 = linear(k2, H1, H2)
    w3, b3 = linear(k3, H2, BODY_INFOS)

    w1a = w1[:STATE_EMB].astype(jnp.bfloat16)                 # (256, 512)
    w1b = w1[STATE_EMB:].astype(jnp.bfloat16)                 # (2, 512)
    w2 = w2.astype(jnp.bfloat16)                              # (512, 256)

    w3p = jnp.zeros((H2, OUT_PAD), jnp.float32).at[:, :BODY_INFOS].set(w3)
    w3p = w3p.astype(jnp.bfloat16)                            # (256, 128)
    b3p = jnp.zeros((1, OUT_PAD), jnp.float32).at[:, :BODY_INFOS].set(b3)

    return (w1a, w1b, b1, w2, b2, w3p, b3p)


def _reference(state_emb, body_infos, params):
    """Pure-JAX f32 reference of the same forward pass."""
    w1a, w1b, b1, w2, b2, w3p, b3p = params
    x = jnp.concatenate([state_emb, body_infos], axis=-1)
    w1 = jnp.concatenate([w1a, w1b], axis=0).astype(jnp.float32)
    h1 = jnp.maximum(x @ w1 + b1, 0.0)
    h2 = jnp.maximum(h1 @ w2.astype(jnp.float32) + b2, 0.0)
    w3 = w3p.astype(jnp.float32)[:, :BODY_INFOS]
    b3 = b3p[:, :BODY_INFOS]
    return jax.nn.sigmoid(h2 @ w3 + b3)


if __name__ == "__main__":
    key = jax.random.PRNGKey(0)
    k_params, k_state, k_body = jax.random.split(key, 3)

    params = init_params(k_params)

    batch = 8
    state_emb = jax.random.normal(k_state, (batch, STATE_EMB), jnp.float32)
    body_infos = jax.random.uniform(k_body, (batch, BODY_INFOS), jnp.float32)

    out = goal_state_predictor(state_emb, body_infos, params)
    out = jax.block_until_ready(out)

    ref = _reference(state_emb, body_infos, params)
    assert out.shape == (batch, BODY_INFOS), out.shape
    # Tolerance loosened vs. the pure-f32 reference because matmul operands are bf16.
    assert jnp.allclose(out, ref, atol=2e-2), "mismatch vs reference"

    print("KERNEL_OK")
</pallas_src>

<mosaic_0001>
module attributes {stable_mosaic.version = 11 : i64} {
  func.func @_mlp_kernel(%arg0: i32, %arg1: memref<8x256xf32, #tpu.memory_space<vmem>>, %arg2: memref<8x2xf32, #tpu.memory_space<vmem>>, %arg3: memref<256x512xbf16, #tpu.memory_space<vmem>>, %arg4: memref<2x512xbf16, #tpu.memory_space<vmem>>, %arg5: memref<1x512xf32, #tpu.memory_space<vmem>>, %arg6: memref<512x256xbf16, #tpu.memory_space<vmem>>, %arg7: memref<1x256xf32, #tpu.memory_space<vmem>>, %arg8: memref<256x128xbf16, #tpu.memory_space<vmem>>, %arg9: memref<1x128xf32, #tpu.memory_space<vmem>>, %arg10: memref<8x128xf32, #tpu.memory_space<vmem>>) attributes {dimension_semantics = [#tpu.dimension_semantics<parallel>], iteration_bounds = array<i64: 1>, scalar_prefetch = 0 : i64, scratch_operands = 0 : i64, tpu.core_type = #tpu.core_type<tc>, window_params = [{transform_indices = @transform_0, window_bounds = array<i64: 8, 256>}, {transform_indices = @transform_1, window_bounds = array<i64: 8, 2>}, {pipeline_mode = #tpu.pipeline_mode<synchronous>, transform_indices = @transform_2, window_bounds = array<i64: 256, 512>}, {pipeline_mode = #tpu.pipeline_mode<synchronous>, transform_indices = @transform_3, window_bounds = array<i64: 2, 512>}, {pipeline_mode = #tpu.pipeline_mode<synchronous>, transform_indices = @transform_4, window_bounds = array<i64: 1, 512>}, {pipeline_mode = #tpu.pipeline_mode<synchronous>, transform_indices = @transform_5, window_bounds = array<i64: 512, 256>}, {pipeline_mode = #tpu.pipeline_mode<synchronous>, transform_indices = @transform_6, window_bounds = array<i64: 1, 256>}, {pipeline_mode = #tpu.pipeline_mode<synchronous>, transform_indices = @transform_7, window_bounds = array<i64: 256, 128>}, {pipeline_mode = #tpu.pipeline_mode<synchronous>, transform_indices = @transform_8, window_bounds = array<i64: 1, 128>}, {transform_indices = @transform_9, window_bounds = array<i64: 8, 128>}]} {
    %c0 = arith.constant 0 : index
    %c0_0 = arith.constant 0 : index
    %0 = vector.load %arg1[%c0, %c0_0] : memref<8x256xf32, #tpu.memory_space<vmem>>, vector<8x256xf32>
    %1 = arith.truncf %0 : vector<8x256xf32> to vector<8x256xbf16>
    %c0_1 = arith.constant 0 : index
    %c0_2 = arith.constant 0 : index
    %2 = vector.load %arg3[%c0_1, %c0_2] : memref<256x512xbf16, #tpu.memory_space<vmem>>, vector<256x512xbf16>
    %cst = arith.constant dense<0.000000e+00> : vector<8x512xf32>
    %3 = tpu.matmul %1, %2, %cst {dimension_numbers = #tpu.dot_dimension_numbers<[1], [0], [0], [1], [0, 0, 1, 1], [], []>} : vector<8x256xbf16>, vector<256x512xbf16>, vector<8x512xf32> -> vector<8x512xf32>
    %c0_3 = arith.constant 0 : index
    %c0_4 = arith.constant 0 : index
    %4 = vector.load %arg2[%c0_3, %c0_4] : memref<8x2xf32, #tpu.memory_space<vmem>>, vector<8x2xf32>
    %c0_5 = arith.constant 0 : index
    %c0_6 = arith.constant 0 : index
    %5 = vector.load %arg4[%c0_5, %c0_6] : memref<2x512xbf16, #tpu.memory_space<vmem>>, vector<2x512xbf16>
    %6 = arith.extf %5 : vector<2x512xbf16> to vector<2x512xf32>
    %7 = vector.extract_strided_slice %4 {offsets = [0, 0], sizes = [8, 1], strides = [1, 1]} : vector<8x2xf32> to vector<8x1xf32>
    %8 = vector.extract_strided_slice %6 {offsets = [0, 0], sizes = [1, 512], strides = [1, 1]} : vector<2x512xf32> to vector<1x512xf32>
    %9 = vector.broadcast %7 : vector<8x1xf32> to vector<8x512xf32>
    %10 = vector.broadcast %8 : vector<1x512xf32> to vector<8x512xf32>
    %11 = arith.mulf %9, %10 : vector<8x512xf32>
    %12 = arith.addf %3, %11 : vector<8x512xf32>
    %13 = vector.extract_strided_slice %4 {offsets = [0, 1], sizes = [8, 1], strides = [1, 1]} : vector<8x2xf32> to vector<8x1xf32>
    %14 = vector.extract_strided_slice %6 {offsets = [1, 0], sizes = [1, 512], strides = [1, 1]} : vector<2x512xf32> to vector<1x512xf32>
    %15 = vector.broadcast %13 : vector<8x1xf32> to vector<8x512xf32>
    %16 = vector.broadcast %14 : vector<1x512xf32> to vector<8x512xf32>
    %17 = arith.mulf %15, %16 : vector<8x512xf32>
    %18 = arith.addf %12, %17 : vector<8x512xf32>
    %c0_7 = arith.constant 0 : index
    %c0_8 = arith.constant 0 : index
    %19 = vector.load %arg5[%c0_7, %c0_8] : memref<1x512xf32, #tpu.memory_space<vmem>>, vector<1x512xf32>
    %20 = vector.broadcast %19 : vector<1x512xf32> to vector<8x512xf32>
    %21 = arith.addf %18, %20 : vector<8x512xf32>
    %cst_9 = arith.constant 0.000000e+00 : f32
    %22 = vector.broadcast %cst_9 : f32 to vector<8x512xf32>
    %23 = arith.maximumf %21, %22 : vector<8x512xf32>
    %24 = arith.truncf %23 : vector<8x512xf32> to vector<8x512xbf16>
    %c0_10 = arith.constant 0 : index
    %c0_11 = arith.constant 0 : index
    %25 = vector.load %arg6[%c0_10, %c0_11] : memref<512x256xbf16, #tpu.memory_space<vmem>>, vector<512x256xbf16>
    %cst_12 = arith.constant dense<0.000000e+00> : vector<8x256xf32>
    %26 = tpu.matmul %24, %25, %cst_12 {dimension_numbers = #tpu.dot_dimension_numbers<[1], [0], [0], [1], [0, 0, 1, 1], [], []>} : vector<8x512xbf16>, vector<512x256xbf16>, vector<8x256xf32> -> vector<8x256xf32>
    %c0_13 = arith.constant 0 : index
    %c0_14 = arith.constant 0 : index
    %27 = vector.load %arg7[%c0_13, %c0_14] : memref<1x256xf32, #tpu.memory_space<vmem>>, vector<1x256xf32>
    %28 = vector.broadcast %27 : vector<1x256xf32> to vector<8x256xf32>
    %29 = arith.addf %26, %28 : vector<8x256xf32>
    %cst_15 = arith.constant 0.000000e+00 : f32
    %30 = vector.broadcast %cst_15 : f32 to vector<8x256xf32>
    %31 = arith.maximumf %29, %30 : vector<8x256xf32>
    %32 = arith.truncf %31 : vector<8x256xf32> to vector<8x256xbf16>
    %c0_16 = arith.constant 0 : index
    %c0_17 = arith.constant 0 : index
    %33 = vector.load %arg8[%c0_16, %c0_17] : memref<256x128xbf16, #tpu.memory_space<vmem>>, vector<256x128xbf16>
    %cst_18 = arith.constant dense<0.000000e+00> : vector<8x128xf32>
    %34 = tpu.matmul %32, %33, %cst_18 {dimension_numbers = #tpu.dot_dimension_numbers<[1], [0], [0], [1], [0, 0, 1, 1], [], []>} : vector<8x256xbf16>, vector<256x128xbf16>, vector<8x128xf32> -> vector<8x128xf32>
    %c0_19 = arith.constant 0 : index
    %c0_20 = arith.constant 0 : index
    %35 = vector.load %arg9[%c0_19, %c0_20] : memref<1x128xf32, #tpu.memory_space<vmem>>, vector<1x128xf32>
    %36 = vector.broadcast %35 : vector<1x128xf32> to vector<8x128xf32>
    %37 = arith.addf %34, %36 : vector<8x128xf32>
    %38 = arith.negf %37 : vector<8x128xf32>
    %39 = math.exp %38 : vector<8x128xf32>
    %cst_21 = arith.constant 1.000000e+00 : f32
    %40 = vector.broadcast %cst_21 : f32 to vector<8x128xf32>
    %41 = arith.addf %40, %39 : vector<8x128xf32>
    %42 = arith.divf %40, %41 : vector<8x128xf32>
    %c0_22 = arith.constant 0 : index
    %c0_23 = arith.constant 0 : index
    %43 = vector.load %arg10[%c0_22, %c0_23] : memref<8x128xf32, #tpu.memory_space<vmem>>, vector<8x128xf32>
    tpu.vector_store %arg10[%c0_22, %c0_23], %42 {strides = array<i32>} : memref<8x128xf32, #tpu.memory_space<vmem>>, vector<8x128xf32>,
    return
  }
  func.func @transform_0(%arg0: i32) -> (i32, i32) {
    %c0_i32 = arith.constant 0 : i32
    %c0_i32_0 = arith.constant 0 : i32
    return %arg0, %c0_i32 : i32, i32
  }
  func.func @transform_1(%arg0: i32) -> (i32, i32) {
    %c0_i32 = arith.constant 0 : i32
    %c0_i32_0 = arith.constant 0 : i32
    return %arg0, %c0_i32 : i32, i32
  }
  func.func @transform_2(%arg0: i32) -> (i32, i32) {
    %c0_i32 = arith.constant 0 : i32
    %c0_i32_0 = arith.constant 0 : i32
    %c0_i32_1 = arith.constant 0 : i32
    return %c0_i32, %c0_i32_0 : i32, i32
  }
  func.func @transform_3(%arg0: i32) -> (i32, i32) {
    %c0_i32 = arith.constant 0 : i32
    %c0_i32_0 = arith.constant 0 : i32
    %c0_i32_1 = arith.constant 0 : i32
    return %c0_i32, %c0_i32_0 : i32, i32
  }
  func.func @transform_4(%arg0: i32) -> (i32, i32) {
    %c0_i32 = arith.constant 0 : i32
    %c0_i32_0 = arith.constant 0 : i32
    %c0_i32_1 = arith.constant 0 : i32
    return %c0_i32, %c0_i32_0 : i32, i32
  }
  func.func @transform_5(%arg0: i32) -> (i32, i32) {
    %c0_i32 = arith.constant 0 : i32
    %c0_i32_0 = arith.constant 0 : i32
    %c0_i32_1 = arith.constant 0 : i32
    return %c0_i32, %c0_i32_0 : i32, i32
  }
  func.func @transform_6(%arg0: i32) -> (i32, i32) {
    %c0_i32 = arith.constant 0 : i32
    %c0_i32_0 = arith.constant 0 : i32
    %c0_i32_1 = arith.constant 0 : i32
    return %c0_i32, %c0_i32_0 : i32, i32
  }
  func.func @transform_7(%arg0: i32) -> (i32, i32) {
    %c0_i32 = arith.constant 0 : i32
    %c0_i32_0 = arith.constant 0 : i32
    %c0_i32_1 = arith.constant 0 : i32
    return %c0_i32, %c0_i32_0 : i32, i32
  }
  func.func @transform_8(%arg0: i32) -> (i32, i32) {
    %c0_i32 = arith.constant 0 : i32
    %c0_i32_0 = arith.constant 0 : i32
    %c0_i32_1 = arith.constant 0 : i32
    return %c0_i32, %c0_i32_0 : i32, i32
  }
  func.func @transform_9(%arg0: i32) -> (i32, i32) {
    %c0_i32 = arith.constant 0 : i32
    %c0_i32_0 = arith.constant 0 : i32
    return %arg0, %c0_i32 : i32, i32
  }
}

</mosaic_0001>

<llo_original>
// kernel: tpu_custom_call.1
$region0: #{tpu_custom_call.1}
  #allocation0 [shape = 'u32[]', space=smem, size = 0x4, offset = 0x4, fixed_abs, tag = 'smem constant byte address 0x4 - core index']
  #allocation1 [shape = 'u32[72,128]{1,0:T(1,128)}', space=vmem, size = 0x9000, scoped, tag = 'internal scratch']
  %s0 = inlined_call_operand.hbm [shape: f32[8,256], index: 0, kind: input, shape index: {}]
  %s1 = inlined_call_operand.vmem [shape: f32[8,2], index: 1, kind: input, shape index: {}]
  %s2 = inlined_call_operand.hbm [shape: bf16[256,512], index: 2, kind: input, shape index: {}]
  %s3 = inlined_call_operand.vmem [shape: bf16[2,512], index: 3, kind: input, shape index: {}]
  %s4 = inlined_call_operand.vmem [shape: f32[1,512], index: 4, kind: input, shape index: {}]
  %s5 = inlined_call_operand.hbm [shape: bf16[512,256], index: 5, kind: input, shape index: {}]
  %s6 = inlined_call_operand.vmem [shape: f32[1,256], index: 6, kind: input, shape index: {}]
  %s7 = inlined_call_operand.hbm [shape: bf16[256,128], index: 7, kind: input, shape index: {}]
  %s8 = inlined_call_operand.vmem [shape: f32[1,128], index: 8, kind: input, shape index: {}]
  %s9 = inlined_call_operand.hbm [shape: f32[8,128], index: 9, kind: output, shape index: {}]
  %s10 = sld [smem:[#allocation0]]
  $region62: #{tpu_custom_call.1} parent=0
    _
  %s12 = ssub.s32 1, %s10
  %s13 = scalar_select 0, %s12, %s10
  $region1: #{tpu_custom_call.1} parent=0
    #allocation2 [shape = 'u8[8192]{0}', space=vmem, size = 0x2000, scoped, tag = 'input window, operand 0, single buffered']
    #allocation3 [shape = 's32[1]{0}', space=sflag, size = 0x4, scoped, tag = 'scoped memory for tpu_custom_call.1']
    #allocation4 [shape = 's32[1]{0}', space=sflag, size = 0x4, scoped, tag = 'scoped memory for tpu_custom_call.1']
    #allocation5 [shape = 'u8[262144]{0}', space=vmem, size = 0x40000, scoped, tag = 'input window, operand 2, single buffered']
    #allocation6 [shape = 's32[1]{0}', space=sflag, size = 0x4, scoped, tag = 'scoped memory for tpu_custom_call.1']
    #allocation7 [shape = 'u8[262144]{0}', space=vmem, size = 0x40000, scoped, tag = 'input window, operand 5, single buffered']
    #allocation8 [shape = 'u8[65536]{0}', space=vmem, size = 0x10000, scoped, tag = 'input window, operand 7, single buffered']
    #allocation9 [shape = 's32[1]{0}', space=sflag, size = 0x4, scoped, tag = 'scoped memory for tpu_custom_call.1']
    #allocation10 [shape = 'u8[4096]{0}', space=vmem, size = 0x1000, scoped, tag = 'output window, operand 0, single buffered']
    %14 = vsyncpa [#allocation3], 0
    %15 = vsyncpa [#allocation6], 0
    %16 = vsyncpa [#allocation9], 0
    %17 = vsyncpa [#allocation4], 0
    // Predicated region
    $region2: #{tpu_custom_call.1} parent=1 // pred_check
      _
    $region3: #{tpu_custom_call.1} parent=1 // pred_check_branch
      %19 = sbr.rel (0) target = $region5
    $region4: #{tpu_custom_call.1} parent=1 // pred_region
      %21 = vsyncadd [#allocation3], 0
      %s23 = sshll.u32 %s0, 4
      %s24 = int_to_ptr.hbm [resolvable:$true] %s23
      %s25 = sshll.u32 [#allocation2], 4
      %s26 = int_to_ptr.vmem [resolvable:$true] %s25
      %28 = dma.hbm_to_vmem [thread:$0]  %s24, 256, %s26, [#allocation3]
    $region5: #{tpu_custom_call.1} parent=1 // pred_fallthru
      _
    // Predicated region
    $region6: #{tpu_custom_call.1} parent=1 // pred_check
      _
    $region7: #{tpu_custom_call.1} parent=1 // pred_check_branch
      %30 = sbr.rel (0) target = $region9
    $region8: #{tpu_custom_call.1} parent=1 // pred_region
      _
    $region9: #{tpu_custom_call.1} parent=1 // pred_fallthru
      _
    // Predicated region
    $region10: #{tpu_custom_call.1} parent=1 // pred_check
      _
    $region11: #{tpu_custom_call.1} parent=1 // pred_check_branch
      %32 = sbr.rel (0) target = $region13
    $region12: #{tpu_custom_call.1} parent=1 // pred_region
      %34 = vsyncadd [#allocation6], 0
      %s35 = sshll.u32 %s2, 4
      %s36 = int_to_ptr.hbm [resolvable:$true] %s35
      %s37 = sshll.u32 [#allocation5], 4
      %s38 = int_to_ptr.vmem [resolvable:$true] %s37
      %43 = dma.hbm_to_vmem [thread:$0]  %s36, 8192, %s38, [#allocation6], 256, 256, 16
    $region13: #{tpu_custom_call.1} parent=1 // pred_fallthru
      _
    // Predicated region
    $region14: #{tpu_custom_call.1} parent=1 // pred_check
      _
    $region15: #{tpu_custom_call.1} parent=1 // pred_check_branch
      %45 = sbr.rel (0) target = $region17
    $region16: #{tpu_custom_call.1} parent=1 // pred_region
      _
    $region17: #{tpu_custom_call.1} parent=1 // pred_fallthru
      _
    // Predicated region
    $region18: #{tpu_custom_call.1} parent=1 // pred_check
      _
    $region19: #{tpu_custom_call.1} parent=1 // pred_check_branch
      %47 = sbr.rel (0) target = $region21
    $region20: #{tpu_custom_call.1} parent=1 // pred_region
      _
    $region21: #{tpu_custom_call.1} parent=1 // pred_fallthru
      _
    // Predicated region
    $region22: #{tpu_custom_call.1} parent=1 // pred_check
      _
    $region23: #{tpu_custom_call.1} parent=1 // pred_check_branch
      %49 = sbr.rel (0) target = $region25
    $region24: #{tpu_custom_call.1} parent=1 // pred_region
      %51 = vsyncadd [#allocation6], 0
      %s52 = sshll.u32 %s5, 4
      %s53 = int_to_ptr.hbm [resolvable:$true] %s52
      %s54 = sshll.u32 [#allocation7], 4
      %s55 = int_to_ptr.vmem [resolvable:$true] %s54
      %60 = dma.hbm_to_vmem [thread:$0]  %s53, 8192, %s55, [#allocation6], 128, 128, 8
    $region25: #{tpu_custom_call.1} parent=1 // pred_fallthru
      _
    // Predicated region
    $region26: #{tpu_custom_call.1} parent=1 // pred_check
      _
    $region27: #{tpu_custom_call.1} parent=1 // pred_check_branch
      %62 = sbr.rel (0) target = $region29
    $region28: #{tpu_custom_call.1} parent=1 // pred_region
      _
    $region29: #{tpu_custom_call.1} parent=1 // pred_fallthru
      _
    // Predicated region
    $region30: #{tpu_custom_call.1} parent=1 // pred_check
      _
    $region31: #{tpu_custom_call.1} parent=1 // pred_check_branch
      %64 = sbr.rel (0) target = $region33
    $region32: #{tpu_custom_call.1} parent=1 // pred_region
      %66 = vsyncadd [#allocation9], 0
      %s67 = sshll.u32 %s7, 4
      %s68 = int_to_ptr.hbm [resolvable:$true] %s67
      %s69 = sshll.u32 [#allocation8], 4
      %s70 = int_to_ptr.vmem [resolvable:$true] %s69
      %75 = dma.hbm_to_vmem [thread:$0]  %s68, 2048, %s70, [#allocation9], 64, 64, 4
    $region33: #{tpu_custom_call.1} parent=1 // pred_fallthru
      _
    // Predicated region
    $region34: #{tpu_custom_call.1} parent=1 // pred_check
      _
    $region35: #{tpu_custom_call.1} parent=1 // pred_check_branch
      %77 = sbr.rel (0) target = $region37
    $region36: #{tpu_custom_call.1} parent=1 // pred_region
      _
    $region37: #{tpu_custom_call.1} parent=1 // pred_fallthru
      _
    // Predicated region
    $region38: #{tpu_custom_call.1} parent=1 // pred_check
      _
    $region39: #{tpu_custom_call.1} parent=1 // pred_check_branch
      %79 = sbr.rel (0) target = $region41
    $region40: #{tpu_custom_call.1} parent=1 // pred_region
      %81 = dma.done [#allocation3], 256
    $region41: #{tpu_custom_call.1} parent=1 // pred_fallthru
      _
    // Predicated region
    $region42: #{tpu_custom_call.1} parent=1 // pred_check
      _
    $region43: #{tpu_custom_call.1} parent=1 // pred_check_branch
      %83 = sbr.rel (0) target = $region45
    $region44: #{tpu_custom_call.1} parent=1 // pred_region
      %85 = dma.done [#allocation6], 8192
    $region45: #{tpu_custom_call.1} parent=1 // pred_fallthru
      _
    // Predicated region
    $region46: #{tpu_custom_call.1} parent=1 // pred_check
      _
    $region47: #{tpu_custom_call.1} parent=1 // pred_check_branch
      %87 = sbr.rel (0) target = $region49
    $region48: #{tpu_custom_call.1} parent=1 // pred_region
      %89 = dma.done [#allocation6], 8192
    $region49: #{tpu_custom_call.1} parent=1 // pred_fallthru
      _
    // Predicated region
    $region50: #{tpu_custom_call.1} parent=1 // pred_check
      _
    $region51: #{tpu_custom_call.1} parent=1 // pred_check_branch
      %91 = sbr.rel (0) target = $region53
    $region52: #{tpu_custom_call.1} parent=1 // pred_region
      %93 = dma.done [#allocation9], 2048
    $region53: #{tpu_custom_call.1} parent=1 // pred_fallthru
      _
    %v94 = vld [vmem:[#allocation2] sm:$0xff]
    %v95 = vld [vmem:[#allocation2 + $0x8] sm:$0xff]
    %v96 = vpack.c.bf16 %v94, %v94
    %v97 = vpack.c.bf16 %v95, %v95
    %v98 = vld [vmem:[#allocation5] sm:$0xff]
    %v99 = vld [vmem:[#allocation5 + $0x8] sm:$0xff]
    %v100 = vld [vmem:[#allocation5 + $0x10] sm:$0xff]
    %v101 = vld [vmem:[#allocation5 + $0x18] sm:$0xff]
    %v102 = vld [vmem:[#allocation5 + $0x20] sm:$0xff]
    %v103 = vld [vmem:[#allocation5 + $0x28] sm:$0xff]
    %v104 = vld [vmem:[#allocation5 + $0x30] sm:$0xff]
    %v105 = vld [vmem:[#allocation5 + $0x38] sm:$0xff]
    %v106 = vld [vmem:[#allocation5 + $0x40] sm:$0xff]
    %v107 = vld [vmem:[#allocation5 + $0x48] sm:$0xff]
    %v108 = vld [vmem:[#allocation5 + $0x50] sm:$0xff]
    %v109 = vld [vmem:[#allocation5 + $0x58] sm:$0xff]
    %v110 = vld [vmem:[#allocation5 + $0x60] sm:$0xff]
    %v111 = vld [vmem:[#allocation5 + $0x68] sm:$0xff]
    %v112 = vld [vmem:[#allocation5 + $0x70] sm:$0xff]
    %v113 = vld [vmem:[#allocation5 + $0x78] sm:$0xff]
    %v114 = vld [vmem:[#allocation5 + $0x80] sm:$0xff]
    %v115 = vld [vmem:[#allocation5 + $0x88] sm:$0xff]
    %v116 = vld [vmem:[#allocation5 + $0x90] sm:$0xff]
    %v117 = vld [vmem:[#allocation5 + $0x98] sm:$0xff]
    %v118 = vld [vmem:[#allocation5 + $0xa0] sm:$0xff]
    %v119 = vld [vmem:[#allocation5 + $0xa8] sm:$0xff]
    %v120 = vld [vmem:[#allocation5 + $0xb0] sm:$0xff]
    %v121 = vld [vmem:[#allocation5 + $0xb8] sm:$0xff]
    %v122 = vld [vmem:[#allocation5 + $0xc0] sm:$0xff]
    %v123 = vld [vmem:[#allocation5 + $0xc8] sm:$0xff]
    %v124 = vld [vmem:[#allocation5 + $0xd0] sm:$0xff]
    %v125 = vld [vmem:[#allocation5 + $0xd8] sm:$0xff]
    %v126 = vld [vmem:[#allocation5 + $0xe0] sm:$0xff]
    %v127 = vld [vmem:[#allocation5 + $0xe8] sm:$0xff]
    %v128 = vld [vmem:[#allocation5 + $0xf0] sm:$0xff]
    %v129 = vld [vmem:[#allocation5 + $0xf8] sm:$0xff]
    %v130 = vld [vmem:[#allocation5 + $0x100] sm:$0xff]
    %v131 = vld [vmem:[#allocation5 + $0x108] sm:$0xff]
    %v132 = vld [vmem:[#allocation5 + $0x110] sm:$0xff]
    %v133 = vld [vmem:[#allocation5 + $0x118] sm:$0xff]
    %v134 = vld [vmem:[#allocation5 + $0x120] sm:$0xff]
    %v135 = vld [vmem:[#allocation5 + $0x128] sm:$0xff]
    %v136 = vld [vmem:[#allocation5 + $0x130] sm:$0xff]
    %v137 = vld [vmem:[#allocation5 + $0x138] sm:$0xff]
    %v138 = vld [vmem:[#allocation5 + $0x140] sm:$0xff]
    %v139 = vld [vmem:[#allocation5 + $0x148] sm:$0xff]
    %v140 = vld [vmem:[#allocation5 + $0x150] sm:$0xff]
    %v141 = vld [vmem:[#allocation5 + $0x158] sm:$0xff]
    %v142 = vld [vmem:[#allocation5 + $0x160] sm:$0xff]
    %v143 = vld [vmem:[#allocation5 + $0x168] sm:$0xff]
    %v144 = vld [vmem:[#allocation5 + $0x170] sm:$0xff]
    %v145 = vld [vmem:[#allocation5 + $0x178] sm:$0xff]
    %v146 = vld [vmem:[#allocation5 + $0x180] sm:$0xff]
    %v147 = vld [vmem:[#allocation5 + $0x188] sm:$0xff]
    %v148 = vld [vmem:[#allocation5 + $0x190] sm:$0xff]
    %v149 = vld [vmem:[#allocation5 + $0x198] sm:$0xff]
    %v150 = vld [vmem:[#allocation5 + $0x1a0] sm:$0xff]
    %v151 = vld [vmem:[#allocation5 + $0x1a8] sm:$0xff]
    %v152 = vld [vmem:[#allocation5 + $0x1b0] sm:$0xff]
    %v153 = vld [vmem:[#allocation5 + $0x1b8] sm:$0xff]
    %v154 = vld [vmem:[#allocation5 + $0x1c0] sm:$0xff]
    %v155 = vld [vmem:[#allocation5 + $0x1c8] sm:$0xff]
    %v156 = vld [vmem:[#allocation5 + $0x1d0] sm:$0xff]
    %v157 = vld [vmem:[#allocation5 + $0x1d8] sm:$0xff]
    %v158 = vld [vmem:[#allocation5 + $0x1e0] sm:$0xff]
    %v159 = vld [vmem:[#allocation5 + $0x1e8] sm:$0xff]
    %v160 = vld [vmem:[#allocation5 + $0x1f0] sm:$0xff]
    %v161 = vld [vmem:[#allocation5 + $0x1f8] sm:$0xff]
    %v162 = vld [vmem:[%s1] sm:$0xff]
    %v163 = vld [vmem:[%s3] sm:$0xf]
    %v164 = vunpack.c.l.bf16 %v163
    %166 = vset.pattern.permute.xlu0 0
    %167 = vperm.xlu0 %166, %v162
    %v168 = vpop.permute.xlu0 %167
    %v171 = vperm.slane %v164, 0
    %v172 = vperm.slane %v164, 2
    %v173 = vperm.slane %v164, 4
    %v174 = vperm.slane %v164, 6
    %v179 = vperm.slane %v171, 0
    %v180 = vperm.slane %v172, 0
    %v181 = vperm.slane %v173, 0
    %v182 = vperm.slane %v174, 0
    %v183 = vmul.f32 %v168, %v179
    %v184 = vmul.f32 %v168, %v180
    %v185 = vmul.f32 %v168, %v181
    %v186 = vmul.f32 %v168, %v182
    %v251 = vunpack.c.l.b16 %v98
    %v252 = vunpack.c.h.b16 %v98
    %v253 = vunpack.c.l.b16 %v99
    %v254 = vunpack.c.h.b16 %v99
    %v255 = vunpack.c.l.b16 %v100
    %v256 = vunpack.c.h.b16 %v100
    %v257 = vunpack.c.l.b16 %v101
    %v258 = vunpack.c.h.b16 %v101
    %v259 = vunpack.c.l.b16 %v102
    %v260 = vunpack.c.h.b16 %v102
    %v261 = vunpack.c.l.b16 %v103
    %v262 = vunpack.c.h.b16 %v103
    %v263 = vunpack.c.l.b16 %v104
    %v264 = vunpack.c.h.b16 %v104
    %v265 = vunpack.c.l.b16 %v105
    %v266 = vunpack.c.h.b16 %v105
    %v267 = vunpack.c.l.b16 %v106
    %v268 = vunpack.c.h.b16 %v106
    %v269 = vunpack.c.l.b16 %v107
    %v270 = vunpack.c.h.b16 %v107
    %v271 = vunpack.c.l.b16 %v108
    %v272 = vunpack.c.h.b16 %v108
    %v273 = vunpack.c.l.b16 %v109
    %v274 = vunpack.c.h.b16 %v109
    %v275 = vunpack.c.l.b16 %v110
    %v276 = vunpack.c.h.b16 %v110
    %v277 = vunpack.c.l.b16 %v111
    %v278 = vunpack.c.h.b16 %v111
    %v279 = vunpack.c.l.b16 %v112
    %v280 = vunpack.c.h.b16 %v112
    %v281 = vunpack.c.l.b16 %v113
    %v282 = vunpack.c.h.b16 %v113
    %v283 = vunpack.c.l.b16 %v114
    %v284 = vunpack.c.h.b16 %v114
    %v285 = vunpack.c.l.b16 %v115
    %v286 = vunpack.c.h.b16 %v115
    %v287 = vunpack.c.l.b16 %v116
    %v288 = vunpack.c.h.b16 %v116
    %v289 = vunpack.c.l.b16 %v117
    %v290 = vunpack.c.h.b16 %v117
    %v291 = vunpack.c.l.b16 %v118
    %v292 = vunpack.c.h.b16 %v118
    %v293 = vunpack.c.l.b16 %v119
    %v294 = vunpack.c.h.b16 %v119
    %v295 = vunpack.c.l.b16 %v120
    %v296 = vunpack.c.h.b16 %v120
    %v297 = vunpack.c.l.b16 %v121
    %v298 = vunpack.c.h.b16 %v121
    %v299 = vunpack.c.l.b16 %v122
    %v300 = vunpack.c.h.b16 %v122
    %v301 = vunpack.c.l.b16 %v123
    %v302 = vunpack.c.h.b16 %v123
    %v303 = vunpack.c.l.b16 %v124
    %v304 = vunpack.c.h.b16 %v124
    %v305 = vunpack.c.l.b16 %v125
    %v306 = vunpack.c.h.b16 %v125
    %v307 = vunpack.c.l.b16 %v126
    %v308 = vunpack.c.h.b16 %v126
    %v309 = vunpack.c.l.b16 %v127
    %v310 = vunpack.c.h.b16 %v127
    %v311 = vunpack.c.l.b16 %v128
    %v312 = vunpack.c.h.b16 %v128
    %v313 = vunpack.c.l.b16 %v129
    %v314 = vunpack.c.h.b16 %v129
    %v315 = vunpack.c.l.b16 %v130
    %v316 = vunpack.c.h.b16 %v130
    %v317 = vunpack.c.l.b16 %v131
    %v318 = vunpack.c.h.b16 %v131
    %v319 = vunpack.c.l.b16 %v132
    %v320 = vunpack.c.h.b16 %v132
    %v321 = vunpack.c.l.b16 %v133
    %v322 = vunpack.c.h.b16 %v133
    %v323 = vunpack.c.l.b16 %v134
    %v324 = vunpack.c.h.b16 %v134
    %v325 = vunpack.c.l.b16 %v135
    %v326 = vunpack.c.h.b16 %v135
    %v327 = vunpack.c.l.b16 %v136
    %v328 = vunpack.c.h.b16 %v136
    %v329 = vunpack.c.l.b16 %v137
    %v330 = vunpack.c.h.b16 %v137
    %v331 = vunpack.c.l.b16 %v138
    %v332 = vunpack.c.h.b16 %v138
    %v333 = vunpack.c.l.b16 %v139
    %v334 = vunpack.c.h.b16 %v139
    %v335 = vunpack.c.l.b16 %v140
    %v336 = vunpack.c.h.b16 %v140
    %v337 = vunpack.c.l.b16 %v141
    %v338 = vunpack.c.h.b16 %v141
    %v339 = vunpack.c.l.b16 %v142
    %v340 = vunpack.c.h.b16 %v142
    %v341 = vunpack.c.l.b16 %v143
    %v342 = vunpack.c.h.b16 %v143
    %v343 = vunpack.c.l.b16 %v144
    %v344 = vunpack.c.h.b16 %v144
    %v345 = vunpack.c.l.b16 %v145
    %v346 = vunpack.c.h.b16 %v145
    %v347 = vunpack.c.l.b16 %v146
    %v348 = vunpack.c.h.b16 %v146
    %v349 = vunpack.c.l.b16 %v147
    %v350 = vunpack.c.h.b16 %v147
    %v351 = vunpack.c.l.b16 %v148
    %v352 = vunpack.c.h.b16 %v148
    %v353 = vunpack.c.l.b16 %v149
    %v354 = vunpack.c.h.b16 %v149
    %v355 = vunpack.c.l.b16 %v150
    %v356 = vunpack.c.h.b16 %v150
    %v357 = vunpack.c.l.b16 %v151
    %v358 = vunpack.c.h.b16 %v151
    %v359 = vunpack.c.l.b16 %v152
    %v360 = vunpack.c.h.b16 %v152
    %v361 = vunpack.c.l.b16 %v153
    %v362 = vunpack.c.h.b16 %v153
    %v363 = vunpack.c.l.b16 %v154
    %v364 = vunpack.c.h.b16 %v154
    %v365 = vunpack.c.l.b16 %v155
    %v366 = vunpack.c.h.b16 %v155
    %v367 = vunpack.c.l.b16 %v156
    %v368 = vunpack.c.h.b16 %v156
    %v369 = vunpack.c.l.b16 %v157
    %v370 = vunpack.c.h.b16 %v157
    %v371 = vunpack.c.l.b16 %v158
    %v372 = vunpack.c.h.b16 %v158
    %v373 = vunpack.c.l.b16 %v159
    %v374 = vunpack.c.h.b16 %v159
    %v375 = vunpack.c.l.b16 %v160
    %v376 = vunpack.c.h.b16 %v160
    %v377 = vunpack.c.l.b16 %v161
    %v378 = vunpack.c.h.b16 %v161
    %v379 = vpack.c.b16 %v255, %v251
    %v380 = vpack.c.b16 %v256, %v252
    %v381 = vpack.c.b16 %v257, %v253
    %v382 = vpack.c.b16 %v258, %v254
    %v383 = vpack.c.b16 %v263, %v259
    %v384 = vpack.c.b16 %v264, %v260
    %v385 = vpack.c.b16 %v265, %v261
    %v386 = vpack.c.b16 %v266, %v262
    %v387 = vpack.c.b16 %v271, %v267
    %v388 = vpack.c.b16 %v272, %v268
    %v389 = vpack.c.b16 %v273, %v269
    %v390 = vpack.c.b16 %v274, %v270
    %v391 = vpack.c.b16 %v279, %v275
    %v392 = vpack.c.b16 %v280, %v276
    %v393 = vpack.c.b16 %v281, %v277
    %v394 = vpack.c.b16 %v282, %v278
    %v395 = vpack.c.b16 %v287, %v283
    %v396 = vpack.c.b16 %v288, %v284
    %v397 = vpack.c.b16 %v289, %v285
    %v398 = vpack.c.b16 %v290, %v286
    %v399 = vpack.c.b16 %v295, %v291
    %v400 = vpack.c.b16 %v296, %v292
    %v401 = vpack.c.b16 %v297, %v293
    %v402 = vpack.c.b16 %v298, %v294
    %v403 = vpack.c.b16 %v303, %v299
    %v404 = vpack.c.b16 %v304, %v300
    %v405 = vpack.c.b16 %v305, %v301
    %v406 = vpack.c.b16 %v306, %v302
    %v407 = vpack.c.b16 %v311, %v307
    %v408 = vpack.c.b16 %v312, %v308
    %v409 = vpack.c.b16 %v313, %v309
    %v410 = vpack.c.b16 %v314, %v310
    %v411 = vpack.c.b16 %v319, %v315
    %v412 = vpack.c.b16 %v320, %v316
    %v413 = vpack.c.b16 %v321, %v317
    %v414 = vpack.c.b16 %v322, %v318
    %v415 = vpack.c.b16 %v327, %v323
    %v416 = vpack.c.b16 %v328, %v324
    %v417 = vpack.c.b16 %v329, %v325
    %v418 = vpack.c.b16 %v330, %v326
    %v419 = vpack.c.b16 %v335, %v331
    %v420 = vpack.c.b16 %v336, %v332
    %v421 = vpack.c.b16 %v337, %v333
    %v422 = vpack.c.b16 %v338, %v334
    %v423 = vpack.c.b16 %v343, %v339
    %v424 = vpack.c.b16 %v344, %v340
    %v425 = vpack.c.b16 %v345, %v341
    %v426 = vpack.c.b16 %v346, %v342
    %v427 = vpack.c.b16 %v351, %v347
    %v428 = vpack.c.b16 %v352, %v348
    %v429 = vpack.c.b16 %v353, %v349
    %v430 = vpack.c.b16 %v354, %v350
    %v431 = vpack.c.b16 %v359, %v355
    %v432 = vpack.c.b16 %v360, %v356
    %v433 = vpack.c.b16 %v361, %v357
    %v434 = vpack.c.b16 %v362, %v358
    %v435 = vpack.c.b16 %v367, %v363
    %v436 = vpack.c.b16 %v368, %v364
    %v437 = vpack.c.b16 %v369, %v365
    %v438 = vpack.c.b16 %v370, %v366
    %v439 = vpack.c.b16 %v375, %v371
    %v440 = vpack.c.b16 %v376, %v372
    %v441 = vpack.c.b16 %v377, %v373
    %v442 = vpack.c.b16 %v378, %v374
    %507 = vmatpush.bf16.msra.mxu0 %v407
    %508 = vmatpush.bf16.msra.mxu0 %v403
    %509 = vmatpush.bf16.msra.mxu0 %v399
    %510 = vmatpush.bf16.msra.mxu0 %v395
    %511 = vmatpush.bf16.msra.mxu0 %v391
    %512 = vmatpush.bf16.msra.mxu0 %v387
    %513 = vmatpush.bf16.msra.mxu0 %v383
    %514 = vmatpush.bf16.msra.mxu0 %v379
    %515 = vmatmul.bf16.gmra.mxu0 %v96
    %v516 = vpop.f32.mrf.mxu0
    %v517 = vadd.f32 %v183, %v516
    %v518 = vpop.f32.mrf.mxu0
    %519 = vdwg.mxu0
    %520 = vmatpush.bf16.msra.mxu0 %v439
    %521 = vmatpush.bf16.msra.mxu0 %v435
    %522 = vmatpush.bf16.msra.mxu0 %v431
    %523 = vmatpush.bf16.msra.mxu0 %v427
    %524 = vmatpush.bf16.msra.mxu0 %v423
    %525 = vmatpush.bf16.msra.mxu0 %v419
    %526 = vmatpush.bf16.msra.mxu0 %v415
    %527 = vmatpush.bf16.msra.mxu0 %v411
    %528 = vmatmul.bf16.gmra.mxu0 %v97
    %v529 = vpop.f32.mrf.mxu0
    %v530 = vadd.f32 %v517, %v529
    %v531 = vpop.f32.mrf.mxu0
    %532 = vdwg.mxu0
    %533 = vmatpush.bf16.msra.mxu0 %v408
    %534 = vmatpush.bf16.msra.mxu0 %v404
    %535 = vmatpush.bf16.msra.mxu0 %v400
    %536 = vmatpush.bf16.msra.mxu0 %v396
    %537 = vmatpush.bf16.msra.mxu0 %v392
    %538 = vmatpush.bf16.msra.mxu0 %v388
    %539 = vmatpush.bf16.msra.mxu0 %v384
    %540 = vmatpush.bf16.msra.mxu0 %v380
    %541 = vmatmul.bf16.gmra.mxu0 %v96
    %v542 = vpop.f32.mrf.mxu0
    %v543 = vadd.f32 %v184, %v542
    %v544 = vpop.f32.mrf.mxu0
    %545 = vdwg.mxu0
    %546 = vmatpush.bf16.msra.mxu0 %v440
    %547 = vmatpush.bf16.msra.mxu0 %v436
    %548 = vmatpush.bf16.msra.mxu0 %v432
    %549 = vmatpush.bf16.msra.mxu0 %v428
    %550 = vmatpush.bf16.msra.mxu0 %v424
    %551 = vmatpush.bf16.msra.mxu0 %v420
    %552 = vmatpush.bf16.msra.mxu0 %v416
    %553 = vmatpush.bf16.msra.mxu0 %v412
    %554 = vmatmul.bf16.gmra.mxu0 %v97
    %v555 = vpop.f32.mrf.mxu0
    %v556 = vadd.f32 %v543, %v555
    %v557 = vpop.f32.mrf.mxu0
    %558 = vdwg.mxu0
    %559 = vmatpush.bf16.msra.mxu0 %v409
    %560 = vmatpush.bf16.msra.mxu0 %v405
    %561 = vmatpush.bf16.msra.mxu0 %v401
    %562 = vmatpush.bf16.msra.mxu0 %v397
    %563 = vmatpush.bf16.msra.mxu0 %v393
    %564 = vmatpush.bf16.msra.mxu0 %v389
    %565 = vmatpush.bf16.msra.mxu0 %v385
    %566 = vmatpush.bf16.msra.mxu0 %v381
    %567 = vmatmul.bf16.gmra.mxu0 %v96
    %v568 = vpop.f32.mrf.mxu0
    %v569 = vadd.f32 %v185, %v568
    %v570 = vpop.f32.mrf.mxu0
    %571 = vdwg.mxu0
    %572 = vmatpush.bf16.msra.mxu0 %v441
    %573 = vmatpush.bf16.msra.mxu0 %v437
    %574 = vmatpush.bf16.msra.mxu0 %v433
    %575 = vmatpush.bf16.msra.mxu0 %v429
    %576 = vmatpush.bf16.msra.mxu0 %v425
    %577 = vmatpush.bf16.msra.mxu0 %v421
    %578 = vmatpush.bf16.msra.mxu0 %v417
    %579 = vmatpush.bf16.msra.mxu0 %v413
    %580 = vmatmul.bf16.gmra.mxu0 %v97
    %v581 = vpop.f32.mrf.mxu0
    %v582 = vadd.f32 %v569, %v581
    %v583 = vpop.f32.mrf.mxu0
    %584 = vdwg.mxu0
    %585 = vmatpush.bf16.msra.mxu0 %v410
    %586 = vmatpush.bf16.msra.mxu0 %v406
    %587 = vmatpush.bf16.msra.mxu0 %v402
    %588 = vmatpush.bf16.msra.mxu0 %v398
    %589 = vmatpush.bf16.msra.mxu0 %v394
    %590 = vmatpush.bf16.msra.mxu0 %v390
    %591 = vmatpush.bf16.msra.mxu0 %v386
    %592 = vmatpush.bf16.msra.mxu0 %v382
    %593 = vmatmul.bf16.gmra.mxu0 %v96
    %v594 = vpop.f32.mrf.mxu0
    %v595 = vadd.f32 %v186, %v594
    %v596 = vpop.f32.mrf.mxu0
    %597 = vdwg.mxu0
    %598 = vmatpush.bf16.msra.mxu0 %v442
    %599 = vmatpush.bf16.msra.mxu0 %v438
    %600 = vmatpush.bf16.msra.mxu0 %v434
    %601 = vmatpush.bf16.msra.mxu0 %v430
    %602 = vmatpush.bf16.msra.mxu0 %v426
    %603 = vmatpush.bf16.msra.mxu0 %v422
    %604 = vmatpush.bf16.msra.mxu0 %v418
    %605 = vmatpush.bf16.msra.mxu0 %v414
    %606 = vmatmul.bf16.gmra.mxu0 %v97
    %v607 = vpop.f32.mrf.mxu0
    %v608 = vadd.f32 %v595, %v607
    %v609 = vpop.f32.mrf.mxu0
    %610 = vdwg.mxu0
    %611 = vset.pattern.permute.xlu0 1
    %612 = vperm.xlu0 %611, %v162
    %v613 = vpop.permute.xlu0 %612
    %v615 = vperm.slane %v164, 1
    %v616 = vperm.slane %v164, 3
    %v617 = vperm.slane %v164, 5
    %v618 = vperm.slane %v164, 7
    %v623 = vperm.slane %v615, 1
    %v624 = vperm.slane %v616, 1
    %v625 = vperm.slane %v617, 1
    %v626 = vperm.slane %v618, 1
    %v627 = vmul.f32 %v613, %v623
    %v628 = vmul.f32 %v613, %v624
    %v629 = vmul.f32 %v613, %v625
    %v630 = vmul.f32 %v613, %v626
    %v631 = vadd.f32 %v530, %v627
    %v632 = vadd.f32 %v556, %v628
    %v633 = vadd.f32 %v582, %v629
    %v634 = vadd.f32 %v608, %v630
    %v635 = vld [vmem:[%s4] sm:$0xf]
    %v637 = vperm.slane %v635, 0
    %v638 = vperm.slane %v635, 1
    %v639 = vperm.slane %v635, 2
    %v640 = vperm.slane %v635, 3
    %v645 = vadd.f32 %v631, %v637
    %v646 = vadd.f32 %v632, %v638
    %v647 = vadd.f32 %v633, %v639
    %v648 = vadd.f32 %v634, %v640
    %v649 = vmax.f32 %v645, 0.0
    %v650 = vmax.f32 %v646, 0.0
    %v651 = vmax.f32 %v647, 0.0
    %v652 = vmax.f32 %v648, 0.0
    %v653 = vpack.c.bf16 %v649, %v649
    %v654 = vpack.c.bf16 %v650, %v650
    %v655 = vpack.c.bf16 %v651, %v651
    %v656 = vpack.c.bf16 %v652, %v652
    %v657 = vld [vmem:[#allocation7] sm:$0xff]
    %v658 = vld [vmem:[#allocation7 + $0x8] sm:$0xff]
    %v659 = vld [vmem:[#allocation7 + $0x10] sm:$0xff]
    %v660 = vld [vmem:[#allocation7 + $0x18] sm:$0xff]
    %v661 = vld [vmem:[#allocation7 + $0x20] sm:$0xff]
    %v662 = vld [vmem:[#allocation7 + $0x28] sm:$0xff]
    %v663 = vld [vmem:[#allocation7 + $0x30] sm:$0xff]
    %v664 = vld [vmem:[#allocation7 + $0x38] sm:$0xff]
    %v665 = vld [vmem:[#allocation7 + $0x40] sm:$0xff]
    %v666 = vld [vmem:[#allocation7 + $0x48] sm:$0xff]
    %v667 = vld [vmem:[#allocation7 + $0x50] sm:$0xff]
    %v668 = vld [vmem:[#allocation7 + $0x58] sm:$0xff]
    %v669 = vld [vmem:[#allocation7 + $0x60] sm:$0xff]
    %v670 = vld [vmem:[#allocation7 + $0x68] sm:$0xff]
    %v671 = vld [vmem:[#allocation7 + $0x70] sm:$0xff]
    %v672 = vld [vmem:[#allocation7 + $0x78] sm:$0xff]
    %v673 = vld [vmem:[#allocation7 + $0x80] sm:$0xff]
    %v674 = vld [vmem:[#allocation7 + $0x88] sm:$0xff]
    %v675 = vld [vmem:[#allocation7 + $0x90] sm:$0xff]
    %v676 = vld [vmem:[#allocation7 + $0x98] sm:$0xff]
    %v677 = vld [vmem:[#allocation7 + $0xa0] sm:$0xff]
    %v678 = vld [vmem:[#allocation7 + $0xa8] sm:$0xff]
    %v679 = vld [vmem:[#allocation7 + $0xb0] sm:$0xff]
    %v680 = vld [vmem:[#allocation7 + $0xb8] sm:$0xff]
    %v681 = vld [vmem:[#allocation7 + $0xc0] sm:$0xff]
    %v682 = vld [vmem:[#allocation7 + $0xc8] sm:$0xff]
    %v683 = vld [vmem:[#allocation7 + $0xd0] sm:$0xff]
    %v684 = vld [vmem:[#allocation7 + $0xd8] sm:$0xff]
    %v685 = vld [vmem:[#allocation7 + $0xe0] sm:$0xff]
    %v686 = vld [vmem:[#allocation7 + $0xe8] sm:$0xff]
    %v687 = vld [vmem:[#allocation7 + $0xf0] sm:$0xff]
    %v688 = vld [vmem:[#allocation7 + $0xf8] sm:$0xff]
    %v689 = vld [vmem:[#allocation7 + $0x100] sm:$0xff]
    %v690 = vld [vmem:[#allocation7 + $0x108] sm:$0xff]
    %v691 = vld [vmem:[#allocation7 + $0x110] sm:$0xff]
    %v692 = vld [vmem:[#allocation7 + $0x118] sm:$0xff]
    %v693 = vld [vmem:[#allocation7 + $0x120] sm:$0xff]
    %v694 = vld [vmem:[#allocation7 + $0x128] sm:$0xff]
    %v695 = vld [vmem:[#allocation7 + $0x130] sm:$0xff]
    %v696 = vld [vmem:[#allocation7 + $0x138] sm:$0xff]
    %v697 = vld [vmem:[#allocation7 + $0x140] sm:$0xff]
    %v698 = vld [vmem:[#allocation7 + $0x148] sm:$0xff]
    %v699 = vld [vmem:[#allocation7 + $0x150] sm:$0xff]
    %v700 = vld [vmem:[#allocation7 + $0x158] sm:$0xff]
    %v701 = vld [vmem:[#allocation7 + $0x160] sm:$0xff]
    %v702 = vld [vmem:[#allocation7 + $0x168] sm:$0xff]
    %v703 = vld [vmem:[#allocation7 + $0x170] sm:$0xff]
    %v704 = vld [vmem:[#allocation7 + $0x178] sm:$0xff]
    %v705 = vld [vmem:[#allocation7 + $0x180] sm:$0xff]
    %v706 = vld [vmem:[#allocation7 + $0x188] sm:$0xff]
    %v707 = vld [vmem:[#allocation7 + $0x190] sm:$0xff]
    %v708 = vld [vmem:[#allocation7 + $0x198] sm:$0xff]
    %v709 = vld [vmem:[#allocation7 + $0x1a0] sm:$0xff]
    %v710 = vld [vmem:[#allocation7 + $0x1a8] sm:$0xff]
    %v711 = vld [vmem:[#allocation7 + $0x1b0] sm:$0xff]
    %v712 = vld [vmem:[#allocation7 + $0x1b8] sm:$0xff]
    %v713 = vld [vmem:[#allocation7 + $0x1c0] sm:$0xff]
    %v714 = vld [vmem:[#allocation7 + $0x1c8] sm:$0xff]
    %v715 = vld [vmem:[#allocation7 + $0x1d0] sm:$0xff]
    %v716 = vld [vmem:[#allocation7 + $0x1d8] sm:$0xff]
    %v717 = vld [vmem:[#allocation7 + $0x1e0] sm:$0xff]
    %v718 = vld [vmem:[#allocation7 + $0x1e8] sm:$0xff]
    %v719 = vld [vmem:[#allocation7 + $0x1f0] sm:$0xff]
    %v720 = vld [vmem:[#allocation7 + $0x1f8] sm:$0xff]
    %v721 = vld [vmem:[%s6] sm:$0x3]
    %v723 = vperm.slane %v721, 0
    %v724 = vperm.slane %v721, 1
    %v791 = vunpack.c.l.b16 %v657
    %v792 = vunpack.c.h.b16 %v657
    %v793 = vunpack.c.l.b16 %v658
    %v794 = vunpack.c.h.b16 %v658
    %v795 = vunpack.c.l.b16 %v659
    %v796 = vunpack.c.h.b16 %v659
    %v797 = vunpack.c.l.b16 %v660
    %v798 = vunpack.c.h.b16 %v660
    %v799 = vunpack.c.l.b16 %v661
    %v800 = vunpack.c.h.b16 %v661
    %v801 = vunpack.c.l.b16 %v662
    %v802 = vunpack.c.h.b16 %v662
    %v803 = vunpack.c.l.b16 %v663
    %v804 = vunpack.c.h.b16 %v663
    %v805 = vunpack.c.l.b16 %v664
    %v806 = vunpack.c.h.b16 %v664
    %v807 = vunpack.c.l.b16 %v665
    %v808 = vunpack.c.h.b16 %v665
    %v809 = vunpack.c.l.b16 %v666
    %v810 = vunpack.c.h.b16 %v666
    %v811 = vunpack.c.l.b16 %v667
    %v812 = vunpack.c.h.b16 %v667
    %v813 = vunpack.c.l.b16 %v668
    %v814 = vunpack.c.h.b16 %v668
    %v815 = vunpack.c.l.b16 %v669
    %v816 = vunpack.c.h.b16 %v669
    %v817 = vunpack.c.l.b16 %v670
    %v818 = vunpack.c.h.b16 %v670
    %v819 = vunpack.c.l.b16 %v671
    %v820 = vunpack.c.h.b16 %v671
    %v821 = vunpack.c.l.b16 %v672
    %v822 = vunpack.c.h.b16 %v672
    %v823 = vunpack.c.l.b16 %v673
    %v824 = vunpack.c.h.b16 %v673
    %v825 = vunpack.c.l.b16 %v674
    %v826 = vunpack.c.h.b16 %v674
    %v827 = vunpack.c.l.b16 %v675
    %v828 = vunpack.c.h.b16 %v675
    %v829 = vunpack.c.l.b16 %v676
    %v830 = vunpack.c.h.b16 %v676
    %v831 = vunpack.c.l.b16 %v677
    %v832 = vunpack.c.h.b16 %v677
    %v833 = vunpack.c.l.b16 %v678
    %v834 = vunpack.c.h.b16 %v678
    %v835 = vunpack.c.l.b16 %v679
    %v836 = vunpack.c.h.b16 %v679
    %v837 = vunpack.c.l.b16 %v680
    %v838 = vunpack.c.h.b16 %v680
    %v839 = vunpack.c.l.b16 %v681
    %v840 = vunpack.c.h.b16 %v681
    %v841 = vunpack.c.l.b16 %v682
    %v842 = vunpack.c.h.b16 %v682
    %v843 = vunpack.c.l.b16 %v683
    %v844 = vunpack.c.h.b16 %v683
    %v845 = vunpack.c.l.b16 %v684
    %v846 = vunpack.c.h.b16 %v684
    %v847 = vunpack.c.l.b16 %v685
    %v848 = vunpack.c.h.b16 %v685
    %v849 = vunpack.c.l.b16 %v686
    %v850 = vunpack.c.h.b16 %v686
    %v851 = vunpack.c.l.b16 %v687
    %v852 = vunpack.c.h.b16 %v687
    %v853 = vunpack.c.l.b16 %v688
    %v854 = vunpack.c.h.b16 %v688
    %v855 = vunpack.c.l.b16 %v689
    %v856 = vunpack.c.h.b16 %v689
    %v857 = vunpack.c.l.b16 %v690
    %v858 = vunpack.c.h.b16 %v690
    %v859 = vunpack.c.l.b16 %v691
    %v860 = vunpack.c.h.b16 %v691
    %v861 = vunpack.c.l.b16 %v692
    %v862 = vunpack.c.h.b16 %v692
    %v863 = vunpack.c.l.b16 %v693
    %v864 = vunpack.c.h.b16 %v693
    %v865 = vunpack.c.l.b16 %v694
    %v866 = vunpack.c.h.b16 %v694
    %v867 = vunpack.c.l.b16 %v695
    %v868 = vunpack.c.h.b16 %v695
    %v869 = vunpack.c.l.b16 %v696
    %v870 = vunpack.c.h.b16 %v696
    %v871 = vunpack.c.l.b16 %v697
    %v872 = vunpack.c.h.b16 %v697
    %v873 = vunpack.c.l.b16 %v698
    %v874 = vunpack.c.h.b16 %v698
    %v875 = vunpack.c.l.b16 %v699
    %v876 = vunpack.c.h.b16 %v699
    %v877 = vunpack.c.l.b16 %v700
    %v878 = vunpack.c.h.b16 %v700
    %v879 = vunpack.c.l.b16 %v701
    %v880 = vunpack.c.h.b16 %v701
    %v881 = vunpack.c.l.b16 %v702
    %v882 = vunpack.c.h.b16 %v702
    %v883 = vunpack.c.l.b16 %v703
    %v884 = vunpack.c.h.b16 %v703
    %v885 = vunpack.c.l.b16 %v704
    %v886 = vunpack.c.h.b16 %v704
    %v887 = vunpack.c.l.b16 %v705
    %v888 = vunpack.c.h.b16 %v705
    %v889 = vunpack.c.l.b16 %v706
    %v890 = vunpack.c.h.b16 %v706
    %v891 = vunpack.c.l.b16 %v707
    %v892 = vunpack.c.h.b16 %v707
    %v893 = vunpack.c.l.b16 %v708
    %v894 = vunpack.c.h.b16 %v708
    %v895 = vunpack.c.l.b16 %v709
    %v896 = vunpack.c.h.b16 %v709
    %v897 = vunpack.c.l.b16 %v710
    %v898 = vunpack.c.h.b16 %v710
    %v899 = vunpack.c.l.b16 %v711
    %v900 = vunpack.c.h.b16 %v711
    %v901 = vunpack.c.l.b16 %v712
    %v902 = vunpack.c.h.b16 %v712
    %v903 = vunpack.c.l.b16 %v713
    %v904 = vunpack.c.h.b16 %v713
    %v905 = vunpack.c.l.b16 %v714
    %v906 = vunpack.c.h.b16 %v714
    %v907 = vunpack.c.l.b16 %v715
    %v908 = vunpack.c.h.b16 %v715
    %v909 = vunpack.c.l.b16 %v716
    %v910 = vunpack.c.h.b16 %v716
    %v911 = vunpack.c.l.b16 %v717
    %v912 = vunpack.c.h.b16 %v717
    %v913 = vunpack.c.l.b16 %v718
    %v914 = vunpack.c.h.b16 %v718
    %v915 = vunpack.c.l.b16 %v719
    %v916 = vunpack.c.h.b16 %v719
    %v917 = vunpack.c.l.b16 %v720
    %v918 = vunpack.c.h.b16 %v720
    %v919 = vpack.c.b16 %v793, %v791
    %v920 = vpack.c.b16 %v794, %v792
    %v921 = vpack.c.b16 %v797, %v795
    %v922 = vpack.c.b16 %v798, %v796
    %v923 = vpack.c.b16 %v801, %v799
    %v924 = vpack.c.b16 %v802, %v800
    %v925 = vpack.c.b16 %v805, %v803
    %v926 = vpack.c.b16 %v806, %v804
    %v927 = vpack.c.b16 %v809, %v807
    %v928 = vpack.c.b16 %v810, %v808
    %v929 = vpack.c.b16 %v813, %v811
    %v930 = vpack.c.b16 %v814, %v812
    %v931 = vpack.c.b16 %v817, %v815
    %v932 = vpack.c.b16 %v818, %v816
    %v933 = vpack.c.b16 %v821, %v819
    %v934 = vpack.c.b16 %v822, %v820
    %v935 = vpack.c.b16 %v825, %v823
    %v936 = vpack.c.b16 %v826, %v824
    %v937 = vpack.c.b16 %v829, %v827
    %v938 = vpack.c.b16 %v830, %v828
    %v939 = vpack.c.b16 %v833, %v831
    %v940 = vpack.c.b16 %v834, %v832
    %v941 = vpack.c.b16 %v837, %v835
    %v942 = vpack.c.b16 %v838, %v836
    %v943 = vpack.c.b16 %v841, %v839
    %v944 = vpack.c.b16 %v842, %v840
    %v945 = vpack.c.b16 %v845, %v843
    %v946 = vpack.c.b16 %v846, %v844
    %v947 = vpack.c.b16 %v849, %v847
    %v948 = vpack.c.b16 %v850, %v848
    %v949 = vpack.c.b16 %v853, %v851
    %v950 = vpack.c.b16 %v854, %v852
    %v951 = vpack.c.b16 %v857, %v855
    %v952 = vpack.c.b16 %v858, %v856
    %v953 = vpack.c.b16 %v861, %v859
    %v954 = vpack.c.b16 %v862, %v860
    %v955 = vpack.c.b16 %v865, %v863
    %v956 = vpack.c.b16 %v866, %v864
    %v957 = vpack.c.b16 %v869, %v867
    %v958 = vpack.c.b16 %v870, %v868
    %v959 = vpack.c.b16 %v873, %v871
    %v960 = vpack.c.b16 %v874, %v872
    %v961 = vpack.c.b16 %v877, %v875
    %v962 = vpack.c.b16 %v878, %v876
    %v963 = vpack.c.b16 %v881, %v879
    %v964 = vpack.c.b16 %v882, %v880
    %v965 = vpack.c.b16 %v885, %v883
    %v966 = vpack.c.b16 %v886, %v884
    %v967 = vpack.c.b16 %v889, %v887
    %v968 = vpack.c.b16 %v890, %v888
    %v969 = vpack.c.b16 %v893, %v891
    %v970 = vpack.c.b16 %v894, %v892
    %v971 = vpack.c.b16 %v897, %v895
    %v972 = vpack.c.b16 %v898, %v896
    %v973 = vpack.c.b16 %v901, %v899
    %v974 = vpack.c.b16 %v902, %v900
    %v975 = vpack.c.b16 %v905, %v903
    %v976 = vpack.c.b16 %v906, %v904
    %v977 = vpack.c.b16 %v909, %v907
    %v978 = vpack.c.b16 %v910, %v908
    %v979 = vpack.c.b16 %v913, %v911
    %v980 = vpack.c.b16 %v914, %v912
    %v981 = vpack.c.b16 %v917, %v915
    %v982 = vpack.c.b16 %v918, %v916
    %1047 = vmatpush.bf16.msra.mxu0 %v933
    %1048 = vmatpush.bf16.msra.mxu0 %v931
    %1049 = vmatpush.bf16.msra.mxu0 %v929
    %1050 = vmatpush.bf16.msra.mxu0 %v927
    %1051 = vmatpush.bf16.msra.mxu0 %v925
    %1052 = vmatpush.bf16.msra.mxu0 %v923
    %1053 = vmatpush.bf16.msra.mxu0 %v921
    %1054 = vmatpush.bf16.msra.mxu0 %v919
    %1055 = vmatmul.bf16.gmra.mxu0 %v653
    %v1056 = vpop.f32.mrf.mxu0
    %v1057 = vadd.f32 %v723, %v1056
    %v1058 = vpop.f32.mrf.mxu0
    %1059 = vdwg.mxu0
    %1060 = vmatpush.bf16.msra.mxu0 %v949
    %1061 = vmatpush.bf16.msra.mxu0 %v947
    %1062 = vmatpush.bf16.msra.mxu0 %v945
    %1063 = vmatpush.bf16.msra.mxu0 %v943
    %1064 = vmatpush.bf16.msra.mxu0 %v941
    %1065 = vmatpush.bf16.msra.mxu0 %v939
    %1066 = vmatpush.bf16.msra.mxu0 %v937
    %1067 = vmatpush.bf16.msra.mxu0 %v935
    %1068 = vmatmul.bf16.gmra.mxu0 %v654
    %v1069 = vpop.f32.mrf.mxu0
    %v1070 = vadd.f32 %v1057, %v1069
    %v1071 = vpop.f32.mrf.mxu0
    %1072 = vdwg.mxu0
    %1073 = vmatpush.bf16.msra.mxu0 %v965
    %1074 = vmatpush.bf16.msra.mxu0 %v963
    %1075 = vmatpush.bf16.msra.mxu0 %v961
    %1076 = vmatpush.bf16.msra.mxu0 %v959
    %1077 = vmatpush.bf16.msra.mxu0 %v957
    %1078 = vmatpush.bf16.msra.mxu0 %v955
    %1079 = vmatpush.bf16.msra.mxu0 %v953
    %1080 = vmatpush.bf16.msra.mxu0 %v951
    %1081 = vmatmul.bf16.gmra.mxu0 %v655
    %v1082 = vpop.f32.mrf.mxu0
    %v1083 = vadd.f32 %v1070, %v1082
    %v1084 = vpop.f32.mrf.mxu0
    %1085 = vdwg.mxu0
    %1086 = vmatpush.bf16.msra.mxu0 %v981
    %1087 = vmatpush.bf16.msra.mxu0 %v979
    %1088 = vmatpush.bf16.msra.mxu0 %v977
    %1089 = vmatpush.bf16.msra.mxu0 %v975
    %1090 = vmatpush.bf16.msra.mxu0 %v973
    %1091 = vmatpush.bf16.msra.mxu0 %v971
    %1092 = vmatpush.bf16.msra.mxu0 %v969
    %1093 = vmatpush.bf16.msra.mxu0 %v967
    %1094 = vmatmul.bf16.gmra.mxu0 %v656
    %v1095 = vpop.f32.mrf.mxu0
    %v1096 = vadd.f32 %v1083, %v1095
    %v1097 = vpop.f32.mrf.mxu0
    %1098 = vdwg.mxu0
    %1099 = vmatpush.bf16.msra.mxu0 %v934
    %1100 = vmatpush.bf16.msra.mxu0 %v932
    %1101 = vmatpush.bf16.msra.mxu0 %v930
    %1102 = vmatpush.bf16.msra.mxu0 %v928
    %1103 = vmatpush.bf16.msra.mxu0 %v926
    %1104 = vmatpush.bf16.msra.mxu0 %v924
    %1105 = vmatpush.bf16.msra.mxu0 %v922
    %1106 = vmatpush.bf16.msra.mxu0 %v920
    %1107 = vmatmul.bf16.gmra.mxu0 %v653
    %v1108 = vpop.f32.mrf.mxu0
    %v1109 = vadd.f32 %v724, %v1108
    %v1110 = vpop.f32.mrf.mxu0
    %1111 = vdwg.mxu0
    %1112 = vmatpush.bf16.msra.mxu0 %v950
    %1113 = vmatpush.bf16.msra.mxu0 %v948
    %1114 = vmatpush.bf16.msra.mxu0 %v946
    %1115 = vmatpush.bf16.msra.mxu0 %v944
    %1116 = vmatpush.bf16.msra.mxu0 %v942
    %1117 = vmatpush.bf16.msra.mxu0 %v940
    %1118 = vmatpush.bf16.msra.mxu0 %v938
    %1119 = vmatpush.bf16.msra.mxu0 %v936
    %1120 = vmatmul.bf16.gmra.mxu0 %v654
    %v1121 = vpop.f32.mrf.mxu0
    %v1122 = vadd.f32 %v1109, %v1121
    %v1123 = vpop.f32.mrf.mxu0
    %1124 = vdwg.mxu0
    %1125 = vmatpush.bf16.msra.mxu0 %v966
    %1126 = vmatpush.bf16.msra.mxu0 %v964
    %1127 = vmatpush.bf16.msra.mxu0 %v962
    %1128 = vmatpush.bf16.msra.mxu0 %v960
    %1129 = vmatpush.bf16.msra.mxu0 %v958
    %1130 = vmatpush.bf16.msra.mxu0 %v956
    %1131 = vmatpush.bf16.msra.mxu0 %v954
    %1132 = vmatpush.bf16.msra.mxu0 %v952
    %1133 = vmatmul.bf16.gmra.mxu0 %v655
    %v1134 = vpop.f32.mrf.mxu0
    %v1135 = vadd.f32 %v1122, %v1134
    %v1136 = vpop.f32.mrf.mxu0
    %1137 = vdwg.mxu0
    %1138 = vmatpush.bf16.msra.mxu0 %v982
    %1139 = vmatpush.bf16.msra.mxu0 %v980
    %1140 = vmatpush.bf16.msra.mxu0 %v978
    %1141 = vmatpush.bf16.msra.mxu0 %v976
    %1142 = vmatpush.bf16.msra.mxu0 %v974
    %1143 = vmatpush.bf16.msra.mxu0 %v972
    %1144 = vmatpush.bf16.msra.mxu0 %v970
    %1145 = vmatpush.bf16.msra.mxu0 %v968
    %1146 = vmatmul.bf16.gmra.mxu0 %v656
    %v1147 = vpop.f32.mrf.mxu0
    %v1148 = vadd.f32 %v1135, %v1147
    %v1149 = vpop.f32.mrf.mxu0
    %1150 = vdwg.mxu0
    %v1151 = vmax.f32 %v1096, 0.0
    %v1152 = vmax.f32 %v1148, 0.0
    %v1153 = vpack.c.bf16 %v1151, %v1151
    %v1154 = vpack.c.bf16 %v1152, %v1152
    %v1155 = vld [vmem:[#allocation8] sm:$0xf]
    %v1156 = vld [vmem:[#allocation8 + $0x4] sm:$0xf]
    %v1157 = vld [vmem:[#allocation8 + $0x8] sm:$0xf]
    %v1158 = vld [vmem:[#allocation8 + $0xc] sm:$0xf]
    %v1159 = vld [vmem:[#allocation8 + $0x10] sm:$0xf]
    %v1160 = vld [vmem:[#allocation8 + $0x14] sm:$0xf]
    %v1161 = vld [vmem:[#allocation8 + $0x18] sm:$0xf]
    %v1162 = vld [vmem:[#allocation8 + $0x1c] sm:$0xf]
    %v1163 = vld [vmem:[#allocation8 + $0x20] sm:$0xf]
    %v1164 = vld [vmem:[#allocation8 + $0x24] sm:$0xf]
    %v1165 = vld [vmem:[#allocation8 + $0x28] sm:$0xf]
    %v1166 = vld [vmem:[#allocation8 + $0x2c] sm:$0xf]
    %v1167 = vld [vmem:[#allocation8 + $0x30] sm:$0xf]
    %v1168 = vld [vmem:[#allocation8 + $0x34] sm:$0xf]
    %v1169 = vld [vmem:[#allocation8 + $0x38] sm:$0xf]
    %v1170 = vld [vmem:[#allocation8 + $0x3c] sm:$0xf]
    %v1171 = vld [vmem:[#allocation8 + $0x40] sm:$0xf]
    %v1172 = vld [vmem:[#allocation8 + $0x44] sm:$0xf]
    %v1173 = vld [vmem:[#allocation8 + $0x48] sm:$0xf]
    %v1174 = vld [vmem:[#allocation8 + $0x4c] sm:$0xf]
    %v1175 = vld [vmem:[#allocation8 + $0x50] sm:$0xf]
    %v1176 = vld [vmem:[#allocation8 + $0x54] sm:$0xf]
    %v1177 = vld [vmem:[#allocation8 + $0x58] sm:$0xf]
    %v1178 = vld [vmem:[#allocation8 + $0x5c] sm:$0xf]
    %v1179 = vld [vmem:[#allocation8 + $0x60] sm:$0xf]
    %v1180 = vld [vmem:[#allocation8 + $0x64] sm:$0xf]
    %v1181 = vld [vmem:[#allocation8 + $0x68] sm:$0xf]
    %v1182 = vld [vmem:[#allocation8 + $0x6c] sm:$0xf]
    %v1183 = vld [vmem:[#allocation8 + $0x70] sm:$0xf]
    %v1184 = vld [vmem:[#allocation8 + $0x74] sm:$0xf]
    %v1185 = vld [vmem:[#allocation8 + $0x78] sm:$0xf]
    %v1186 = vld [vmem:[#allocation8 + $0x7c] sm:$0xf]
    %v1187 = vld [vmem:[%s8] sm:$0x1]
    %v1189 = vperm.slane %v1187, 0
    %v1223 = vunpack.c.l.b16 %v1155
    %v1224 = vunpack.c.l.b16 %v1156
    %v1225 = vunpack.c.l.b16 %v1157
    %v1226 = vunpack.c.l.b16 %v1158
    %v1227 = vunpack.c.l.b16 %v1159
    %v1228 = vunpack.c.l.b16 %v1160
    %v1229 = vunpack.c.l.b16 %v1161
    %v1230 = vunpack.c.l.b16 %v1162
    %v1231 = vunpack.c.l.b16 %v1163
    %v1232 = vunpack.c.l.b16 %v1164
    %v1233 = vunpack.c.l.b16 %v1165
    %v1234 = vunpack.c.l.b16 %v1166
    %v1235 = vunpack.c.l.b16 %v1167
    %v1236 = vunpack.c.l.b16 %v1168
    %v1237 = vunpack.c.l.b16 %v1169
    %v1238 = vunpack.c.l.b16 %v1170
    %v1239 = vunpack.c.l.b16 %v1171
    %v1240 = vunpack.c.l.b16 %v1172
    %v1241 = vunpack.c.l.b16 %v1173
    %v1242 = vunpack.c.l.b16 %v1174
    %v1243 = vunpack.c.l.b16 %v1175
    %v1244 = vunpack.c.l.b16 %v1176
    %v1245 = vunpack.c.l.b16 %v1177
    %v1246 = vunpack.c.l.b16 %v1178
    %v1247 = vunpack.c.l.b16 %v1179
    %v1248 = vunpack.c.l.b16 %v1180
    %v1249 = vunpack.c.l.b16 %v1181
    %v1250 = vunpack.c.l.b16 %v1182
    %v1251 = vunpack.c.l.b16 %v1183
    %v1252 = vunpack.c.l.b16 %v1184
    %v1253 = vunpack.c.l.b16 %v1185
    %v1254 = vunpack.c.l.b16 %v1186
    %v1255 = vpack.c.b16 %v1224, %v1223
    %v1256 = vpack.c.b16 %v1226, %v1225
    %v1257 = vpack.c.b16 %v1228, %v1227
    %v1258 = vpack.c.b16 %v1230, %v1229
    %v1259 = vpack.c.b16 %v1232, %v1231
    %v1260 = vpack.c.b16 %v1234, %v1233
    %v1261 = vpack.c.b16 %v1236, %v1235
    %v1262 = vpack.c.b16 %v1238, %v1237
    %v1263 = vpack.c.b16 %v1240, %v1239
    %v1264 = vpack.c.b16 %v1242, %v1241
    %v1265 = vpack.c.b16 %v1244, %v1243
    %v1266 = vpack.c.b16 %v1246, %v1245
    %v1267 = vpack.c.b16 %v1248, %v1247
    %v1268 = vpack.c.b16 %v1250, %v1249
    %v1269 = vpack.c.b16 %v1252, %v1251
    %v1270 = vpack.c.b16 %v1254, %v1253
    %1287 = vmatpush.bf16.msra.mxu0 %v1262
    %1288 = vmatpush.bf16.msra.mxu0 %v1261
    %1289 = vmatpush.bf16.msra.mxu0 %v1260
    %1290 = vmatpush.bf16.msra.mxu0 %v1259
    %1291 = vmatpush.bf16.msra.mxu0 %v1258
    %1292 = vmatpush.bf16.msra.mxu0 %v1257
    %1293 = vmatpush.bf16.msra.mxu0 %v1256
    %1294 = vmatpush.bf16.msra.mxu0 %v1255
    %1295 = vmatmul.bf16.gmra.mxu0 %v1153
    %v1296 = vpop.f32.mrf.mxu0
    %v1297 = vadd.f32 %v1189, %v1296
    %v1298 = vpop.f32.mrf.mxu0
    %1299 = vdwg.mxu0
    %1300 = vmatpush.bf16.msra.mxu0 %v1270
    %1301 = vmatpush.bf16.msra.mxu0 %v1269
    %1302 = vmatpush.bf16.msra.mxu0 %v1268
    %1303 = vmatpush.bf16.msra.mxu0 %v1267
    %1304 = vmatpush.bf16.msra.mxu0 %v1266
    %1305 = vmatpush.bf16.msra.mxu0 %v1265
    %1306 = vmatpush.bf16.msra.mxu0 %v1264
    %1307 = vmatpush.bf16.msra.mxu0 %v1263
    %1308 = vmatmul.bf16.gmra.mxu0 %v1154
    %v1309 = vpop.f32.mrf.mxu0
    %v1310 = vadd.f32 %v1297, %v1309
    %v1311 = vpop.f32.mrf.mxu0
    %1312 = vdwg.mxu0
    %v1313 = vxor.u32 %v1310, 2147483648
    %v1314 = vmul.f32 %v1313, 1.442695
    %v1315 = vpow.pop %v1314
    %v1316 = vadd.f32 %v1315, 1.0
    %v1317 = vrcp.pop %v1316
    %v1318 = vmul.f32 %v1316, %v1317
    %v1319 = vsub.f32 1.0, %v1318
    %v1320 = vmul.f32 %v1317, %v1319
    %v1321 = vadd.f32 %v1317, %v1320
    %vm1322 = vweird.f32 %v1316
    %vm1323 = vweird.f32 %v1317
    %vm1324 = vmor %vm1322, %vm1323
    %v1325 = vsel %vm1324, %v1317, %v1321
    %v1326 = vand.u32 2147483647, %v1316
    %vm1327 = vcmp.eq.f32.partialorder %v1326, 8.507059e+37
    %v1328 = vand.u32 %v1316, 2147483648
    %v1329 = vor.u32 1.1754944e-38, %v1328
    %v1330 = vsel %vm1327, %v1329, %v1325
    %v1331 = vmul.f32 1.0, %v1330
    %1332 = vst [vmem:[#allocation10] sm:$0xff] %v1331
    // Predicated region
    $region54: #{tpu_custom_call.1} parent=1 // pred_check
      _
    $region55: #{tpu_custom_call.1} parent=1 // pred_check_branch
      %1334 = sbr.rel (0) target = $region57
    $region56: #{tpu_custom_call.1} parent=1 // pred_region
      %1336 = vsyncadd [#allocation4], 0
      %s1338 = sshll.u32 [#allocation10], 4
      %s1339 = int_to_ptr.vmem [resolvable:$true] %s1338
      %s1340 = sshll.u32 %s9, 4
      %s1341 = int_to_ptr.hbm [resolvable:$true] %s1340
      %1343 = dma.vmem_to_hbm [thread:$0]  %s1339, 128, %s1341, [#allocation4]
    $region57: #{tpu_custom_call.1} parent=1 // pred_fallthru
      _
    // Predicated region
    $region58: #{tpu_custom_call.1} parent=1 // pred_check
      _
    $region59: #{tpu_custom_call.1} parent=1 // pred_check_branch
      %1345 = sbr.rel (0) target = $region61
    $region60: #{tpu_custom_call.1} parent=1 // pred_region
      %1347 = dma.done [#allocation4], 128
    $region61: #{tpu_custom_call.1} parent=1 // pred_fallthru
      _
    %1348 = vsyncpa [#allocation3], 1
    %1349 = vsyncpa [#allocation6], 1
    %1350 = vsyncpa [#allocation9], 1
    %1351 = vsyncpa [#allocation4], 1

</llo_original>
